<compile_context>
chip_gen: v7x
topology: tpu7x:2x2x1
jax: 0.10.0
libtpu: 0.0.40
codegen_flags: <defaults>
</compile_context>

<pallas_src>
import jax
import jax.numpy as jnp
from jax.experimental import pallas as pl
from jax.experimental.pallas import tpu as pltpu


def _cdiv(a, b):
    return -(-a // b)


def _round_up(a, m):
    return _cdiv(a, m) * m


def critic_kernel(
    xa_ref,    # (dx+da, TB)  input features, batch on lanes (actions unscaled)
    w1_ref,    # (H, dx+da)   fc1 weight, action columns pre-scaled by 1/max_action
    w2_ref,    # (H, H)
    w3_ref,    # (H, H)
    b_ref,     # (H, 3)       bias columns [b1 | b2 | b3]
    qp_ref,    # (1, H+1)     [wq row | bq]
    q_ref,     # (1, TB)      output, lane-dense
):
    # fc1 on the (wrapper-side) concatenation; action scale is folded into w1.
    h = jnp.dot(w1_ref[...], xa_ref[...], preferred_element_type=jnp.float32)
    h = jnp.maximum(h + b_ref[:, 0:1], 0.0)

    # fc2
    h = jnp.dot(w2_ref[...], h, preferred_element_type=jnp.float32)
    h = jnp.maximum(h + b_ref[:, 1:2], 0.0)

    # fc3
    h = jnp.dot(w3_ref[...], h, preferred_element_type=jnp.float32)
    h = jnp.maximum(h + b_ref[:, 2:3], 0.0)

    # q_out: (1, H) @ (H, TB) -> lane-dense (1, TB) row.
    H = h.shape[0]
    q = jnp.dot(qp_ref[:, :H], h, preferred_element_type=jnp.float32) + qp_ref[:, H:H + 1]
    q_ref[...] = q.astype(q_ref.dtype)


def critic_forward(kparams, x, actions, *, batch_tile=1024):
    """x: (B, obs+goal) f32, actions: (B, action) f32 -> q: (B, 1) f32."""
    B = x.shape[0]
    dxa = x.shape[1] + actions.shape[1]
    H = kparams["w1"].shape[0]

    # Merge the concat once in the wrapper (one activation stream into the kernel).
    xa = jnp.concatenate([x, actions], axis=1)          # (B, dx+da)

    # Tile selection: per-step overhead dominates this tiny MLP, so use few,
    # big tiles.  TB must be a multiple of 128 (batch sits on the lane axis).
    # When one tile would cover the whole batch, split into 2 balanced tiles so
    # both v7x TensorCores get work (harmless on single-TC v5e/v6e).
    nt = _cdiv(B, batch_tile)
    if nt == 1 and B > 128:
        nt = 2
    TB = _round_up(_cdiv(B, nt), 128)
    Bp = nt * TB
    pad = Bp - B
    if pad:
        xa = jnp.pad(xa, ((0, pad), (0, 0)))
    xa_t = xa.T                                          # (dx+da, Bp): feature-major

    flops = 2 * Bp * (H * dxa + 2 * H * H + H)
    param_bytes = sum(int(v.size) * v.dtype.itemsize for v in kparams.values())
    bytes_accessed = param_bytes + Bp * (dxa + 1) * 4

    def resident(arr):
        # Full-array block + constant index_map: loaded once, stays in VMEM.
        return pl.BlockSpec(arr.shape, lambda i: (0, 0))

    q_row = pl.pallas_call(
        critic_kernel,
        out_shape=jax.ShapeDtypeStruct((1, Bp), jnp.float32),
        grid=(nt,),
        in_specs=[
            pl.BlockSpec((dxa, TB), lambda i: (0, i)),   # activation tile marches over batch
            resident(kparams["w1"]),
            resident(kparams["w2"]),
            resident(kparams["w3"]),
            resident(kparams["b123"]),
            resident(kparams["qp"]),
        ],
        out_specs=pl.BlockSpec((1, TB), lambda i: (0, i)),
        compiler_params=pltpu.CompilerParams(
            dimension_semantics=("parallel",),
        ),
        cost_estimate=pl.CostEstimate(
            flops=int(flops), transcendentals=0, bytes_accessed=int(bytes_accessed)
        ),
    )(
        xa_t,
        kparams["w1"],
        kparams["w2"],
        kparams["w3"],
        kparams["b123"],
        kparams["qp"],
    )
    return q_row[0, :B].reshape(B, 1)


def init_params(key, obs, goal, action, hidden):
    """PyTorch-equivalent parameters: weights stored (in_features, out_features)."""
    in1 = obs + goal + action
    keys = jax.random.split(key, 8)

    def lin_w(kw, fan_in, fan_out):
        bound = 1.0 / jnp.sqrt(fan_in)
        return jax.random.uniform(kw, (fan_in, fan_out), jnp.float32, -bound, bound)

    def lin_b(kb, fan_in, fan_out):
        bound = 1.0 / jnp.sqrt(fan_in)
        return jax.random.uniform(kb, (1, fan_out), jnp.float32, -bound, bound)

    return {
        "w1": lin_w(keys[0], in1, hidden), "b1": lin_b(keys[1], in1, hidden),
        "w2": lin_w(keys[2], hidden, hidden), "b2": lin_b(keys[3], hidden, hidden),
        "w3": lin_w(keys[4], hidden, hidden), "b3": lin_b(keys[5], hidden, hidden),
        "wq": lin_w(keys[6], hidden, 1), "bq": lin_b(keys[7], hidden, 1),
    }


def prepare_kernel_params(params, obs_goal_dim, max_action):
    """One-time param prep (JAX glue, outside the kernel):
       - fold 1/max_action into the action rows of fc1's weight,
       - transpose all weights to (out, in) for the feature-major W @ X layout,
       - pack b1/b2/b3 into one (H, 3) column array and [wq | bq] into (1, H+1)."""
    inv = 1.0 / float(max_action)
    w1 = params["w1"]                                   # (dx+da, H)
    w1 = w1.at[obs_goal_dim:, :].multiply(inv)          # fold action scaling
    b123 = jnp.stack(
        [params["b1"][0], params["b2"][0], params["b3"][0]], axis=1
    )                                                   # (H, 3)
    qp = jnp.concatenate([params["wq"].T, params["bq"]], axis=1)  # (1, H+1)
    return {
        "w1": w1.T,                 # (H, dx+da)
        "w2": params["w2"].T,       # (H, H)
        "w3": params["w3"].T,       # (H, H)
        "b123": b123,               # (H, 3)
        "qp": qp,                   # (1, H+1)
    }


def critic_ref(params, x, actions, max_action):
    """Pure-JAX reference implementing the PyTorch forward exactly."""
    xa = jnp.concatenate([x, actions / max_action], axis=1)
    h = jax.nn.relu(xa @ params["w1"] + params["b1"])
    h = jax.nn.relu(h @ params["w2"] + params["b2"])
    h = jax.nn.relu(h @ params["w3"] + params["b3"])
    return h @ params["wq"] + params["bq"]


if __name__ == "__main__":
    # env_params: obs=10, goal=3, action=4, hidden_unit=32, action_max=2.0 ; half=False
    OBS, GOAL, ACTION, HIDDEN = 10, 3, 4, 32
    MAX_ACTION = 2.0

    key = jax.random.PRNGKey(0)
    kp, kx, ka, kxb, kab = jax.random.split(key, 5)

    params = init_params(kp, OBS, GOAL, ACTION, HIDDEN)
    kparams = prepare_kernel_params(params, OBS + GOAL, MAX_ACTION)

    # Small shapes consistent with the module (batch=2): single grid step.
    x = jax.random.normal(kx, (2, OBS + GOAL), jnp.float32)
    actions = jax.random.normal(ka, (2, ACTION), jnp.float32)
    q = jax.block_until_ready(critic_forward(kparams, x, actions))
    q_ref = critic_ref(params, x, actions, MAX_ACTION)
    assert q.shape == (2, 1)
    assert jnp.allclose(q, q_ref, atol=1e-4, rtol=1e-4), (q, q_ref)

    # Replay-buffer-sized batch: exercises the two-tile (v7x) split, the
    # lane-dense tiling over the batch, resident weights, and batch padding.
    xb = jax.random.normal(kxb, (300, OBS + GOAL), jnp.float32)
    ab = jax.random.normal(kab, (300, ACTION), jnp.float32)
    qb = jax.block_until_ready(critic_forward(kparams, xb, ab))
    qb_ref = critic_ref(params, xb, ab, MAX_ACTION)
    assert qb.shape == (300, 1)
    assert jnp.allclose(qb, qb_ref, atol=1e-4, rtol=1e-4)

    print("KERNEL_OK")
</pallas_src>

<mosaic_0001>
module attributes {stable_mosaic.version = 11 : i64} {
  func.func @critic_kernel(%arg0: i32, %arg1: memref<17x128xf32, #tpu.memory_space<vmem>>, %arg2: memref<32x17xf32, #tpu.memory_space<vmem>>, %arg3: memref<32x32xf32, #tpu.memory_space<vmem>>, %arg4: memref<32x32xf32, #tpu.memory_space<vmem>>, %arg5: memref<32x3xf32, #tpu.memory_space<vmem>>, %arg6: memref<1x33xf32, #tpu.memory_space<vmem>>, %arg7: memref<1x128xf32, #tpu.memory_space<vmem>>) attributes {dimension_semantics = [#tpu.dimension_semantics<parallel>], iteration_bounds = array<i64: 1>, scalar_prefetch = 0 : i64, scratch_operands = 0 : i64, tpu.core_type = #tpu.core_type<tc>, window_params = [{transform_indices = @transform_0, window_bounds = array<i64: 17, 128>}, {pipeline_mode = #tpu.pipeline_mode<synchronous>, transform_indices = @transform_1, window_bounds = array<i64: 32, 17>}, {pipeline_mode = #tpu.pipeline_mode<synchronous>, transform_indices = @transform_2, window_bounds = array<i64: 32, 32>}, {pipeline_mode = #tpu.pipeline_mode<synchronous>, transform_indices = @transform_3, window_bounds = array<i64: 32, 32>}, {pipeline_mode = #tpu.pipeline_mode<synchronous>, transform_indices = @transform_4, window_bounds = array<i64: 32, 3>}, {pipeline_mode = #tpu.pipeline_mode<synchronous>, transform_indices = @transform_5, window_bounds = array<i64: 1, 33>}, {transform_indices = @transform_6, window_bounds = array<i64: 1, 128>}]} {
    %c0 = arith.constant 0 : index
    %c0_0 = arith.constant 0 : index
    %0 = vector.load %arg2[%c0, %c0_0] : memref<32x17xf32, #tpu.memory_space<vmem>>, vector<32x17xf32>
    %c0_1 = arith.constant 0 : index
    %c0_2 = arith.constant 0 : index
    %1 = vector.load %arg1[%c0_1, %c0_2] : memref<17x128xf32, #tpu.memory_space<vmem>>, vector<17x128xf32>
    %cst = arith.constant dense<0.000000e+00> : vector<32x128xf32>
    %2 = tpu.matmul %0, %1, %cst {dimension_numbers = #tpu.dot_dimension_numbers<[1], [0], [0], [1], [0, 0, 1, 1], [], []>} : vector<32x17xf32>, vector<17x128xf32>, vector<32x128xf32> -> vector<32x128xf32>
    %c0_3 = arith.constant 0 : index
    %c0_4 = arith.constant 0 : index
    %3 = vector.load %arg5[%c0_3, %c0_4] : memref<32x3xf32, #tpu.memory_space<vmem>>, vector<32x1xf32>
    %4 = vector.broadcast %3 : vector<32x1xf32> to vector<32x128xf32>
    %5 = arith.addf %2, %4 : vector<32x128xf32>
    %cst_5 = arith.constant 0.000000e+00 : f32
    %6 = vector.broadcast %cst_5 : f32 to vector<32x128xf32>
    %7 = arith.maximumf %5, %6 : vector<32x128xf32>
    %c0_6 = arith.constant 0 : index
    %c0_7 = arith.constant 0 : index
    %8 = vector.load %arg3[%c0_6, %c0_7] : memref<32x32xf32, #tpu.memory_space<vmem>>, vector<32x32xf32>
    %cst_8 = arith.constant dense<0.000000e+00> : vector<32x128xf32>
    %9 = tpu.matmul %8, %7, %cst_8 {dimension_numbers = #tpu.dot_dimension_numbers<[1], [0], [0], [1], [0, 0, 1, 1], [], []>} : vector<32x32xf32>, vector<32x128xf32>, vector<32x128xf32> -> vector<32x128xf32>
    %c0_9 = arith.constant 0 : index
    %c1 = arith.constant 1 : index
    %10 = vector.load %arg5[%c0_9, %c1] : memref<32x3xf32, #tpu.memory_space<vmem>>, vector<32x1xf32>
    %11 = vector.broadcast %10 : vector<32x1xf32> to vector<32x128xf32>
    %12 = arith.addf %9, %11 : vector<32x128xf32>
    %cst_10 = arith.constant 0.000000e+00 : f32
    %13 = vector.broadcast %cst_10 : f32 to vector<32x128xf32>
    %14 = arith.maximumf %12, %13 : vector<32x128xf32>
    %c0_11 = arith.constant 0 : index
    %c0_12 = arith.constant 0 : index
    %15 = vector.load %arg4[%c0_11, %c0_12] : memref<32x32xf32, #tpu.memory_space<vmem>>, vector<32x32xf32>
    %cst_13 = arith.constant dense<0.000000e+00> : vector<32x128xf32>
    %16 = tpu.matmul %15, %14, %cst_13 {dimension_numbers = #tpu.dot_dimension_numbers<[1], [0], [0], [1], [0, 0, 1, 1], [], []>} : vector<32x32xf32>, vector<32x128xf32>, vector<32x128xf32> -> vector<32x128xf32>
    %c0_14 = arith.constant 0 : index
    %c2 = arith.constant 2 : index
    %17 = vector.load %arg5[%c0_14, %c2] : memref<32x3xf32, #tpu.memory_space<vmem>>, vector<32x1xf32>
    %18 = vector.broadcast %17 : vector<32x1xf32> to vector<32x128xf32>
    %19 = arith.addf %16, %18 : vector<32x128xf32>
    %cst_15 = arith.constant 0.000000e+00 : f32
    %20 = vector.broadcast %cst_15 : f32 to vector<32x128xf32>
    %21 = arith.maximumf %19, %20 : vector<32x128xf32>
    %c0_16 = arith.constant 0 : index
    %c0_17 = arith.constant 0 : index
    %22 = vector.load %arg6[%c0_16, %c0_17] : memref<1x33xf32, #tpu.memory_space<vmem>>, vector<1x32xf32>
    %cst_18 = arith.constant dense<0.000000e+00> : vector<1x128xf32>
    %23 = tpu.matmul %22, %21, %cst_18 {dimension_numbers = #tpu.dot_dimension_numbers<[1], [0], [0], [1], [0, 0, 1, 1], [], []>} : vector<1x32xf32>, vector<32x128xf32>, vector<1x128xf32> -> vector<1x128xf32>
    %c0_19 = arith.constant 0 : index
    %c32 = arith.constant 32 : index
    %24 = vector.load %arg6[%c0_19, %c32] : memref<1x33xf32, #tpu.memory_space<vmem>>, vector<1x1xf32>
    %25 = vector.broadcast %24 : vector<1x1xf32> to vector<1x128xf32>
    %26 = arith.addf %23, %25 : vector<1x128xf32>
    %c0_20 = arith.constant 0 : index
    %c0_21 = arith.constant 0 : index
    %27 = vector.load %arg7[%c0_20, %c0_21] : memref<1x128xf32, #tpu.memory_space<vmem>>, vector<1x128xf32>
    tpu.vector_store %arg7[%c0_20, %c0_21], %26 {strides = array<i32>} : memref<1x128xf32, #tpu.memory_space<vmem>>, vector<1x128xf32>,
    return
  }
  func.func @transform_0(%arg0: i32) -> (i32, i32) {
    %c0_i32 = arith.constant 0 : i32
    %c0_i32_0 = arith.constant 0 : i32
    return %c0_i32, %arg0 : i32, i32
  }
  func.func @transform_1(%arg0: i32) -> (i32, i32) {
    %c0_i32 = arith.constant 0 : i32
    %c0_i32_0 = arith.constant 0 : i32
    %c0_i32_1 = arith.constant 0 : i32
    return %c0_i32, %c0_i32_0 : i32, i32
  }
  func.func @transform_2(%arg0: i32) -> (i32, i32) {
    %c0_i32 = arith.constant 0 : i32
    %c0_i32_0 = arith.constant 0 : i32
    %c0_i32_1 = arith.constant 0 : i32
    return %c0_i32, %c0_i32_0 : i32, i32
  }
  func.func @transform_3(%arg0: i32) -> (i32, i32) {
    %c0_i32 = arith.constant 0 : i32
    %c0_i32_0 = arith.constant 0 : i32
    %c0_i32_1 = arith.constant 0 : i32
    return %c0_i32, %c0_i32_0 : i32, i32
  }
  func.func @transform_4(%arg0: i32) -> (i32, i32) {
    %c0_i32 = arith.constant 0 : i32
    %c0_i32_0 = arith.constant 0 : i32
    %c0_i32_1 = arith.constant 0 : i32
    return %c0_i32, %c0_i32_0 : i32, i32
  }
  func.func @transform_5(%arg0: i32) -> (i32, i32) {
    %c0_i32 = arith.constant 0 : i32
    %c0_i32_0 = arith.constant 0 : i32
    %c0_i32_1 = arith.constant 0 : i32
    return %c0_i32, %c0_i32_0 : i32, i32
  }
  func.func @transform_6(%arg0: i32) -> (i32, i32) {
    %c0_i32 = arith.constant 0 : i32
    %c0_i32_0 = arith.constant 0 : i32
    return %c0_i32, %arg0 : i32, i32
  }
}

</mosaic_0001>

<llo_original>
// kernel: tpu_custom_call.1
$region0: #{tpu_custom_call.1}
  #allocation0 [shape = 'u32[]', space=smem, size = 0x4, offset = 0x4, fixed_abs, tag = 'smem constant byte address 0x4 - core index']
  #allocation1 [shape = 'u32[144,128]{1,0:T(1,128)}', space=vmem, size = 0x12000, scoped, tag = 'internal scratch']
  %s0 = inlined_call_operand.vmem [shape: f32[17,128], index: 0, kind: input, shape index: {}]
  %s1 = inlined_call_operand.vmem [shape: f32[32,17], index: 1, kind: input, shape index: {}]
  %s2 = inlined_call_operand.vmem [shape: f32[32,32], index: 2, kind: input, shape index: {}]
  %s3 = inlined_call_operand.vmem [shape: f32[32,32], index: 3, kind: input, shape index: {}]
  %s4 = inlined_call_operand.vmem [shape: f32[32,3], index: 4, kind: input, shape index: {}]
  %s5 = inlined_call_operand.vmem [shape: f32[1,33], index: 5, kind: input, shape index: {}]
  %s6 = inlined_call_operand.hbm [shape: f32[1,128], index: 6, kind: output, shape index: {}]
  %s7 = sld [smem:[#allocation0]]
  $region34: #{tpu_custom_call.1} parent=0
    _
  %s9 = ssub.s32 1, %s7
  %s10 = scalar_select 0, %s9, %s7
  $region1: #{tpu_custom_call.1} parent=0
    #allocation2 [shape = 'u8[512]{0}', space=vmem, size = 0x400, scoped, tag = 'output window, operand 0, single buffered']
    #allocation3 [shape = 's32[1]{0}', space=sflag, size = 0x4, scoped, tag = 'scoped memory for tpu_custom_call.1']
    %11 = vsyncpa [#allocation3], 0
    // Predicated region
    $region2: #{tpu_custom_call.1} parent=1 // pred_check
      _
    $region3: #{tpu_custom_call.1} parent=1 // pred_check_branch
      %13 = sbr.rel (0) target = $region5
    $region4: #{tpu_custom_call.1} parent=1 // pred_region
      _
    $region5: #{tpu_custom_call.1} parent=1 // pred_fallthru
      _
    // Predicated region
    $region6: #{tpu_custom_call.1} parent=1 // pred_check
      _
    $region7: #{tpu_custom_call.1} parent=1 // pred_check_branch
      %15 = sbr.rel (0) target = $region9
    $region8: #{tpu_custom_call.1} parent=1 // pred_region
      _
    $region9: #{tpu_custom_call.1} parent=1 // pred_fallthru
      _
    // Predicated region
    $region10: #{tpu_custom_call.1} parent=1 // pred_check
      _
    $region11: #{tpu_custom_call.1} parent=1 // pred_check_branch
      %17 = sbr.rel (0) target = $region13
    $region12: #{tpu_custom_call.1} parent=1 // pred_region
      _
    $region13: #{tpu_custom_call.1} parent=1 // pred_fallthru
      _
    // Predicated region
    $region14: #{tpu_custom_call.1} parent=1 // pred_check
      _
    $region15: #{tpu_custom_call.1} parent=1 // pred_check_branch
      %19 = sbr.rel (0) target = $region17
    $region16: #{tpu_custom_call.1} parent=1 // pred_region
      _
    $region17: #{tpu_custom_call.1} parent=1 // pred_fallthru
      _
    // Predicated region
    $region18: #{tpu_custom_call.1} parent=1 // pred_check
      _
    $region19: #{tpu_custom_call.1} parent=1 // pred_check_branch
      %21 = sbr.rel (0) target = $region21
    $region20: #{tpu_custom_call.1} parent=1 // pred_region
      _
    $region21: #{tpu_custom_call.1} parent=1 // pred_fallthru
      _
    // Predicated region
    $region22: #{tpu_custom_call.1} parent=1 // pred_check
      _
    $region23: #{tpu_custom_call.1} parent=1 // pred_check_branch
      %23 = sbr.rel (0) target = $region25
    $region24: #{tpu_custom_call.1} parent=1 // pred_region
      _
    $region25: #{tpu_custom_call.1} parent=1 // pred_fallthru
      _
    %v24 = vld [vmem:[%s1] sm:$0xff]
    %v25 = vld [vmem:[%s1 + $0x8] sm:$0xff]
    %v26 = vld [vmem:[%s1 + $0x10] sm:$0xff]
    %v27 = vld [vmem:[%s1 + $0x18] sm:$0xff]
    %v28 = vld [vmem:[%s0] sm:$0xff]
    %v29 = vld [vmem:[%s0 + $0x8] sm:$0xff]
    %v30 = vld [vmem:[%s0 + $0x10] sm:$0x1]
    %v31 = vld [vmem:[%s4] sm:$0xff]
    %v32 = vld [vmem:[%s4 + $0x8] sm:$0xff]
    %v33 = vld [vmem:[%s4 + $0x10] sm:$0xff]
    %v34 = vld [vmem:[%s4 + $0x18] sm:$0xff]
    %36 = vset.pattern.permute.xlu0 0
    %37 = vperm.xlu0 %36, %v31
    %v38 = vpop.permute.xlu0 %37
    %41 = vset.pattern.permute.xlu0 0
    %42 = vperm.xlu0 %41, %v32
    %v43 = vpop.permute.xlu0 %42
    %46 = vset.pattern.permute.xlu0 0
    %47 = vperm.xlu0 %46, %v33
    %v48 = vpop.permute.xlu0 %47
    %51 = vset.pattern.permute.xlu0 0
    %52 = vperm.xlu0 %51, %v34
    %v53 = vpop.permute.xlu0 %52
    %vm55 = vcmask 138240
    %v57 = vsel %vm55, %v24, 0
    %v60 = vsel %vm55, %v25, 0
    %v63 = vsel %vm55, %v26, 0
    %v66 = vsel %vm55, %v27, 0
    %vm68 = vcmask 1040384
    %v70 = vsel %vm68, %v30, 0
    %72 = vmatprep.subr.mxu0 0.0
    %73 = vmatpush1.msra.mxu0 %v28
    %74 = vmatprep.subr.mxu0 0.0
    %75 = vmatpush1.msra.mxu0 %v29
    %76 = vmatprep.subr.mxu0 0.0
    %77 = vmatpush1.msra.mxu0 %v70
    %78 = vmatprep.subr.mxu0 0.0
    %79 = vmatpush1.msra.mxu0 0.0
    %80 = vmatprep.subr.mxu0 0.0
    %81 = vmatpush1.msra.mxu0 0.0
    %82 = vmatprep.subr.mxu0 0.0
    %83 = vmatpush1.msra.mxu0 0.0
    %84 = vmatprep.subr.mxu0 0.0
    %85 = vmatpush1.msra.mxu0 0.0
    %86 = vmatprep.subr.mxu0 0.0
    %87 = vmatpush1.msra.mxu0 0.0
    %88 = vmatprep.subr.mxu0 0.0
    %89 = vmatpush1.msra.mxu0 0.0
    %90 = vmatprep.subr.mxu0 0.0
    %91 = vmatpush1.msra.mxu0 0.0
    %92 = vmatprep.subr.mxu0 0.0
    %93 = vmatpush1.msra.mxu0 0.0
    %94 = vmatprep.subr.mxu0 0.0
    %95 = vmatpush1.msra.mxu0 0.0
    %96 = vmatprep.subr.mxu0 0.0
    %97 = vmatpush1.msra.mxu0 0.0
    %98 = vmatprep.subr.mxu0 0.0
    %99 = vmatpush1.msra.mxu0 0.0
    %100 = vmatprep.subr.mxu0 0.0
    %101 = vmatpush1.msra.mxu0 0.0
    %102 = vmatprep.subr.mxu0 0.0
    %103 = vmatpush1.msra.mxu0 0.0
    %104 = vmatprep.subr.mxu0 0.0
    %105 = vmatpush1.msra.mxu0 0.0
    %106 = vmatprep.subr.mxu0 0.0
    %107 = vmatpush1.msra.mxu0 0.0
    %108 = vmatprep.subr.mxu0 0.0
    %109 = vmatpush1.msra.mxu0 0.0
    %110 = vmatprep.subr.mxu0 0.0
    %111 = vmatpush1.msra.mxu0 0.0
    %112 = vmatprep.subr.mxu0 0.0
    %113 = vmatpush1.msra.mxu0 0.0
    %114 = vmatprep.subr.mxu0 0.0
    %115 = vmatpush1.msra.mxu0 0.0
    %116 = vmatprep.subr.mxu0 0.0
    %117 = vmatpush1.msra.mxu0 0.0
    %118 = vmatprep.subr.mxu0 0.0
    %119 = vmatpush1.msra.mxu0 0.0
    %120 = vmatprep.subr.mxu0 0.0
    %121 = vmatpush1.msra.mxu0 0.0
    %122 = vmatprep.subr.mxu0 0.0
    %123 = vmatpush1.msra.mxu0 0.0
    %124 = vmatprep.subr.mxu0 0.0
    %125 = vmatpush1.msra.mxu0 0.0
    %126 = vmatprep.subr.mxu0 0.0
    %127 = vmatpush1.msra.mxu0 0.0
    %128 = vmatprep.subr.mxu0 0.0
    %129 = vmatpush1.msra.mxu0 0.0
    %130 = vmatprep.subr.mxu0 0.0
    %131 = vmatpush1.msra.mxu0 0.0
    %132 = vmatprep.subr.mxu0 0.0
    %133 = vmatpush1.msra.mxu0 0.0
    %134 = vmatprep.subr.mxu0 0.0
    %135 = vmatpush1.msra.mxu0 0.0
    %136 = vmatprep.mubr.f32.mxu0 0.0
    %137 = vmatmul.mubr.f32.gmra.mrb[0].mxu0 %v57
    %v138 = vpop.f32.mrb[0].mxu0
    %v139 = vadd.f32 %v38, %v138
    %v140 = vpop.f32.mrb[0].mxu0
    %141 = vmatprep.mubr.f32.mxu0 0.0
    %142 = vmatmul.mubr.f32.gmra.mrb[0].mxu0 %v60
    %v143 = vpop.f32.mrb[0].mxu0
    %v144 = vadd.f32 %v43, %v143
    %v145 = vpop.f32.mrb[0].mxu0
    %146 = vmatprep.mubr.f32.mxu0 0.0
    %147 = vmatmul.mubr.f32.gmra.mrb[0].mxu0 %v63
    %v148 = vpop.f32.mrb[0].mxu0
    %v149 = vadd.f32 %v48, %v148
    %v150 = vpop.f32.mrb[0].mxu0
    %151 = vmatprep.mubr.f32.mxu0 0.0
    %152 = vmatmul.mubr.f32.gmra.mrb[0].mxu0 %v66
    %v153 = vpop.f32.mrb[0].mxu0
    %v154 = vadd.f32 %v53, %v153
    %v155 = vpop.f32.mrb[0].mxu0
    %156 = vdwg.mxu0
    %v157 = vmax.f32 %v139, 0.0
    %v158 = vmax.f32 %v144, 0.0
    %v159 = vmax.f32 %v149, 0.0
    %v160 = vmax.f32 %v154, 0.0
    %v161 = vld [vmem:[%s2] sm:$0xff]
    %v162 = vld [vmem:[%s2 + $0x8] sm:$0xff]
    %v163 = vld [vmem:[%s2 + $0x10] sm:$0xff]
    %v164 = vld [vmem:[%s2 + $0x18] sm:$0xff]
    %165 = vset.pattern.permute.xlu0 1
    %166 = vperm.xlu0 %165, %v31
    %v167 = vpop.permute.xlu0 %166
    %169 = vset.pattern.permute.xlu0 1
    %170 = vperm.xlu0 %169, %v32
    %v171 = vpop.permute.xlu0 %170
    %173 = vset.pattern.permute.xlu0 1
    %174 = vperm.xlu0 %173, %v33
    %v175 = vpop.permute.xlu0 %174
    %177 = vset.pattern.permute.xlu0 1
    %178 = vperm.xlu0 %177, %v34
    %v179 = vpop.permute.xlu0 %178
    %vm181 = vcmask 261120
    %v183 = vsel %vm181, %v161, 0
    %v186 = vsel %vm181, %v162, 0
    %v189 = vsel %vm181, %v163, 0
    %v192 = vsel %vm181, %v164, 0
    %194 = vmatprep.subr.mxu0 0.0
    %195 = vmatpush1.msra.mxu0 %v157
    %196 = vmatprep.subr.mxu0 0.0
    %197 = vmatpush1.msra.mxu0 %v158
    %198 = vmatprep.subr.mxu0 0.0
    %199 = vmatpush1.msra.mxu0 %v159
    %200 = vmatprep.subr.mxu0 0.0
    %201 = vmatpush1.msra.mxu0 %v160
    %202 = vmatprep.subr.mxu0 0.0
    %203 = vmatpush1.msra.mxu0 0.0
    %204 = vmatprep.subr.mxu0 0.0
    %205 = vmatpush1.msra.mxu0 0.0
    %206 = vmatprep.subr.mxu0 0.0
    %207 = vmatpush1.msra.mxu0 0.0
    %208 = vmatprep.subr.mxu0 0.0
    %209 = vmatpush1.msra.mxu0 0.0
    %210 = vmatprep.subr.mxu0 0.0
    %211 = vmatpush1.msra.mxu0 0.0
    %212 = vmatprep.subr.mxu0 0.0
    %213 = vmatpush1.msra.mxu0 0.0
    %214 = vmatprep.subr.mxu0 0.0
    %215 = vmatpush1.msra.mxu0 0.0
    %216 = vmatprep.subr.mxu0 0.0
    %217 = vmatpush1.msra.mxu0 0.0
    %218 = vmatprep.subr.mxu0 0.0
    %219 = vmatpush1.msra.mxu0 0.0
    %220 = vmatprep.subr.mxu0 0.0
    %221 = vmatpush1.msra.mxu0 0.0
    %222 = vmatprep.subr.mxu0 0.0
    %223 = vmatpush1.msra.mxu0 0.0
    %224 = vmatprep.subr.mxu0 0.0
    %225 = vmatpush1.msra.mxu0 0.0
    %226 = vmatprep.subr.mxu0 0.0
    %227 = vmatpush1.msra.mxu0 0.0
    %228 = vmatprep.subr.mxu0 0.0
    %229 = vmatpush1.msra.mxu0 0.0
    %230 = vmatprep.subr.mxu0 0.0
    %231 = vmatpush1.msra.mxu0 0.0
    %232 = vmatprep.subr.mxu0 0.0
    %233 = vmatpush1.msra.mxu0 0.0
    %234 = vmatprep.subr.mxu0 0.0
    %235 = vmatpush1.msra.mxu0 0.0
    %236 = vmatprep.subr.mxu0 0.0
    %237 = vmatpush1.msra.mxu0 0.0
    %238 = vmatprep.subr.mxu0 0.0
    %239 = vmatpush1.msra.mxu0 0.0
    %240 = vmatprep.subr.mxu0 0.0
    %241 = vmatpush1.msra.mxu0 0.0
    %242 = vmatprep.subr.mxu0 0.0
    %243 = vmatpush1.msra.mxu0 0.0
    %244 = vmatprep.subr.mxu0 0.0
    %245 = vmatpush1.msra.mxu0 0.0
    %246 = vmatprep.subr.mxu0 0.0
    %247 = vmatpush1.msra.mxu0 0.0
    %248 = vmatprep.subr.mxu0 0.0
    %249 = vmatpush1.msra.mxu0 0.0
    %250 = vmatprep.subr.mxu0 0.0
    %251 = vmatpush1.msra.mxu0 0.0
    %252 = vmatprep.subr.mxu0 0.0
    %253 = vmatpush1.msra.mxu0 0.0
    %254 = vmatprep.subr.mxu0 0.0
    %255 = vmatpush1.msra.mxu0 0.0
    %256 = vmatprep.subr.mxu0 0.0
    %257 = vmatpush1.msra.mxu0 0.0
    %258 = vmatprep.mubr.f32.mxu0 0.0
    %259 = vmatmul.mubr.f32.gmra.mrb[0].mxu0 %v183
    %v260 = vpop.f32.mrb[0].mxu0
    %v261 = vadd.f32 %v167, %v260
    %v262 = vpop.f32.mrb[0].mxu0
    %263 = vmatprep.mubr.f32.mxu0 0.0
    %264 = vmatmul.mubr.f32.gmra.mrb[0].mxu0 %v186
    %v265 = vpop.f32.mrb[0].mxu0
    %v266 = vadd.f32 %v171, %v265
    %v267 = vpop.f32.mrb[0].mxu0
    %268 = vmatprep.mubr.f32.mxu0 0.0
    %269 = vmatmul.mubr.f32.gmra.mrb[0].mxu0 %v189
    %v270 = vpop.f32.mrb[0].mxu0
    %v271 = vadd.f32 %v175, %v270
    %v272 = vpop.f32.mrb[0].mxu0
    %273 = vmatprep.mubr.f32.mxu0 0.0
    %274 = vmatmul.mubr.f32.gmra.mrb[0].mxu0 %v192
    %v275 = vpop.f32.mrb[0].mxu0
    %v276 = vadd.f32 %v179, %v275
    %v277 = vpop.f32.mrb[0].mxu0
    %278 = vdwg.mxu0
    %v279 = vmax.f32 %v261, 0.0
    %v280 = vmax.f32 %v266, 0.0
    %v281 = vmax.f32 %v271, 0.0
    %v282 = vmax.f32 %v276, 0.0
    %v283 = vld [vmem:[%s3] sm:$0xff]
    %v284 = vld [vmem:[%s3 + $0x8] sm:$0xff]
    %v285 = vld [vmem:[%s3 + $0x10] sm:$0xff]
    %v286 = vld [vmem:[%s3 + $0x18] sm:$0xff]
    %287 = vset.pattern.permute.xlu0 2
    %288 = vperm.xlu0 %287, %v31
    %v289 = vpop.permute.xlu0 %288
    %291 = vset.pattern.permute.xlu0 2
    %292 = vperm.xlu0 %291, %v32
    %v293 = vpop.permute.xlu0 %292
    %295 = vset.pattern.permute.xlu0 2
    %296 = vperm.xlu0 %295, %v33
    %v297 = vpop.permute.xlu0 %296
    %299 = vset.pattern.permute.xlu0 2
    %300 = vperm.xlu0 %299, %v34
    %v301 = vpop.permute.xlu0 %300
    %v304 = vsel %vm181, %v283, 0
    %v307 = vsel %vm181, %v284, 0
    %v310 = vsel %vm181, %v285, 0
    %v313 = vsel %vm181, %v286, 0
    %315 = vmatprep.subr.mxu0 0.0
    %316 = vmatpush1.msra.mxu0 %v279
    %317 = vmatprep.subr.mxu0 0.0
    %318 = vmatpush1.msra.mxu0 %v280
    %319 = vmatprep.subr.mxu0 0.0
    %320 = vmatpush1.msra.mxu0 %v281
    %321 = vmatprep.subr.mxu0 0.0
    %322 = vmatpush1.msra.mxu0 %v282
    %323 = vmatprep.subr.mxu0 0.0
    %324 = vmatpush1.msra.mxu0 0.0
    %325 = vmatprep.subr.mxu0 0.0
    %326 = vmatpush1.msra.mxu0 0.0
    %327 = vmatprep.subr.mxu0 0.0
    %328 = vmatpush1.msra.mxu0 0.0
    %329 = vmatprep.subr.mxu0 0.0
    %330 = vmatpush1.msra.mxu0 0.0
    %331 = vmatprep.subr.mxu0 0.0
    %332 = vmatpush1.msra.mxu0 0.0
    %333 = vmatprep.subr.mxu0 0.0
    %334 = vmatpush1.msra.mxu0 0.0
    %335 = vmatprep.subr.mxu0 0.0
    %336 = vmatpush1.msra.mxu0 0.0
    %337 = vmatprep.subr.mxu0 0.0
    %338 = vmatpush1.msra.mxu0 0.0
    %339 = vmatprep.subr.mxu0 0.0
    %340 = vmatpush1.msra.mxu0 0.0
    %341 = vmatprep.subr.mxu0 0.0
    %342 = vmatpush1.msra.mxu0 0.0
    %343 = vmatprep.subr.mxu0 0.0
    %344 = vmatpush1.msra.mxu0 0.0
    %345 = vmatprep.subr.mxu0 0.0
    %346 = vmatpush1.msra.mxu0 0.0
    %347 = vmatprep.subr.mxu0 0.0
    %348 = vmatpush1.msra.mxu0 0.0
    %349 = vmatprep.subr.mxu0 0.0
    %350 = vmatpush1.msra.mxu0 0.0
    %351 = vmatprep.subr.mxu0 0.0
    %352 = vmatpush1.msra.mxu0 0.0
    %353 = vmatprep.subr.mxu0 0.0
    %354 = vmatpush1.msra.mxu0 0.0
    %355 = vmatprep.subr.mxu0 0.0
    %356 = vmatpush1.msra.mxu0 0.0
    %357 = vmatprep.subr.mxu0 0.0
    %358 = vmatpush1.msra.mxu0 0.0
    %359 = vmatprep.subr.mxu0 0.0
    %360 = vmatpush1.msra.mxu0 0.0
    %361 = vmatprep.subr.mxu0 0.0
    %362 = vmatpush1.msra.mxu0 0.0
    %363 = vmatprep.subr.mxu0 0.0
    %364 = vmatpush1.msra.mxu0 0.0
    %365 = vmatprep.subr.mxu0 0.0
    %366 = vmatpush1.msra.mxu0 0.0
    %367 = vmatprep.subr.mxu0 0.0
    %368 = vmatpush1.msra.mxu0 0.0
    %369 = vmatprep.subr.mxu0 0.0
    %370 = vmatpush1.msra.mxu0 0.0
    %371 = vmatprep.subr.mxu0 0.0
    %372 = vmatpush1.msra.mxu0 0.0
    %373 = vmatprep.subr.mxu0 0.0
    %374 = vmatpush1.msra.mxu0 0.0
    %375 = vmatprep.subr.mxu0 0.0
    %376 = vmatpush1.msra.mxu0 0.0
    %377 = vmatprep.subr.mxu0 0.0
    %378 = vmatpush1.msra.mxu0 0.0
    %379 = vmatprep.mubr.f32.mxu0 0.0
    %380 = vmatmul.mubr.f32.gmra.mrb[0].mxu0 %v304
    %v381 = vpop.f32.mrb[0].mxu0
    %v382 = vadd.f32 %v289, %v381
    %v383 = vpop.f32.mrb[0].mxu0
    %384 = vmatprep.mubr.f32.mxu0 0.0
    %385 = vmatmul.mubr.f32.gmra.mrb[0].mxu0 %v307
    %v386 = vpop.f32.mrb[0].mxu0
    %v387 = vadd.f32 %v293, %v386
    %v388 = vpop.f32.mrb[0].mxu0
    %389 = vmatprep.mubr.f32.mxu0 0.0
    %390 = vmatmul.mubr.f32.gmra.mrb[0].mxu0 %v310
    %v391 = vpop.f32.mrb[0].mxu0
    %v392 = vadd.f32 %v297, %v391
    %v393 = vpop.f32.mrb[0].mxu0
    %394 = vmatprep.mubr.f32.mxu0 0.0
    %395 = vmatmul.mubr.f32.gmra.mrb[0].mxu0 %v313
    %v396 = vpop.f32.mrb[0].mxu0
    %v397 = vadd.f32 %v301, %v396
    %v398 = vpop.f32.mrb[0].mxu0
    %399 = vdwg.mxu0
    %v400 = vmax.f32 %v382, 0.0
    %v401 = vmax.f32 %v387, 0.0
    %v402 = vmax.f32 %v392, 0.0
    %v403 = vmax.f32 %v397, 0.0
    %v404 = vld [vmem:[%s5] sm:$0x1]
    %406 = vset.pattern.permute.xlu0 32
    %407 = vperm.xlu0 %406, %v404
    %v408 = vpop.permute.xlu0 %407
    %v410 = vlaneseq
    %v411 = vshrl.u32 %v410, 7
    %v412 = vsub.s32 0, %v411
    %v413 = vrot.slane %v408, %v412
    %v414 = vsel %vm181, %v404, 0
    %416 = vmatprep.subr.mxu0 0.0
    %417 = vmatpush1.msra.mxu0 %v400
    %418 = vmatprep.subr.mxu0 0.0
    %419 = vmatpush1.msra.mxu0 %v401
    %420 = vmatprep.subr.mxu0 0.0
    %421 = vmatpush1.msra.mxu0 %v402
    %422 = vmatprep.subr.mxu0 0.0
    %423 = vmatpush1.msra.mxu0 %v403
    %424 = vmatprep.subr.mxu0 0.0
    %425 = vmatpush1.msra.mxu0 0.0
    %426 = vmatprep.subr.mxu0 0.0
    %427 = vmatpush1.msra.mxu0 0.0
    %428 = vmatprep.subr.mxu0 0.0
    %429 = vmatpush1.msra.mxu0 0.0
    %430 = vmatprep.subr.mxu0 0.0
    %431 = vmatpush1.msra.mxu0 0.0
    %432 = vmatprep.subr.mxu0 0.0
    %433 = vmatpush1.msra.mxu0 0.0
    %434 = vmatprep.subr.mxu0 0.0
    %435 = vmatpush1.msra.mxu0 0.0
    %436 = vmatprep.subr.mxu0 0.0
    %437 = vmatpush1.msra.mxu0 0.0
    %438 = vmatprep.subr.mxu0 0.0
    %439 = vmatpush1.msra.mxu0 0.0
    %440 = vmatprep.subr.mxu0 0.0
    %441 = vmatpush1.msra.mxu0 0.0
    %442 = vmatprep.subr.mxu0 0.0
    %443 = vmatpush1.msra.mxu0 0.0
    %444 = vmatprep.subr.mxu0 0.0
    %445 = vmatpush1.msra.mxu0 0.0
    %446 = vmatprep.subr.mxu0 0.0
    %447 = vmatpush1.msra.mxu0 0.0
    %448 = vmatprep.subr.mxu0 0.0
    %449 = vmatpush1.msra.mxu0 0.0
    %450 = vmatprep.subr.mxu0 0.0
    %451 = vmatpush1.msra.mxu0 0.0
    %452 = vmatprep.subr.mxu0 0.0
    %453 = vmatpush1.msra.mxu0 0.0
    %454 = vmatprep.subr.mxu0 0.0
    %455 = vmatpush1.msra.mxu0 0.0
    %456 = vmatprep.subr.mxu0 0.0
    %457 = vmatpush1.msra.mxu0 0.0
    %458 = vmatprep.subr.mxu0 0.0
    %459 = vmatpush1.msra.mxu0 0.0
    %460 = vmatprep.subr.mxu0 0.0
    %461 = vmatpush1.msra.mxu0 0.0
    %462 = vmatprep.subr.mxu0 0.0
    %463 = vmatpush1.msra.mxu0 0.0
    %464 = vmatprep.subr.mxu0 0.0
    %465 = vmatpush1.msra.mxu0 0.0
    %466 = vmatprep.subr.mxu0 0.0
    %467 = vmatpush1.msra.mxu0 0.0
    %468 = vmatprep.subr.mxu0 0.0
    %469 = vmatpush1.msra.mxu0 0.0
    %470 = vmatprep.subr.mxu0 0.0
    %471 = vmatpush1.msra.mxu0 0.0
    %472 = vmatprep.subr.mxu0 0.0
    %473 = vmatpush1.msra.mxu0 0.0
    %474 = vmatprep.subr.mxu0 0.0
    %475 = vmatpush1.msra.mxu0 0.0
    %476 = vmatprep.subr.mxu0 0.0
    %477 = vmatpush1.msra.mxu0 0.0
    %478 = vmatprep.subr.mxu0 0.0
    %479 = vmatpush1.msra.mxu0 0.0
    %480 = vmatprep.mubr.f32.mxu0 0.0
    %481 = vmatmul.mubr.f32.gmra.mrb[0].mxu0 %v414
    %v482 = vpop.f32.mrb[0].mxu0
    %v483 = vadd.f32 %v413, %v482
    %v484 = vpop.f32.mrb[0].mxu0
    %485 = vdwg.mxu0
    %486 = vst [vmem:[#allocation2] sm:$0x1] %v483
    // Predicated region
    $region26: #{tpu_custom_call.1} parent=1 // pred_check
      _
    $region27: #{tpu_custom_call.1} parent=1 // pred_check_branch
      %488 = sbr.rel (0) target = $region29
    $region28: #{tpu_custom_call.1} parent=1 // pred_region
      %s490 = ssub.s32 16, 16
      %491 = vsyncadd [#allocation3], %s490
      %s493 = sshll.u32 [#allocation2], 4
      %s494 = int_to_ptr.vmem [resolvable:$true] %s493
      %496 = dma.vmem_to_hbm [thread:$0]  %s494, 16, %s6, [#allocation3]
    $region29: #{tpu_custom_call.1} parent=1 // pred_fallthru
      _
    // Predicated region
    $region30: #{tpu_custom_call.1} parent=1 // pred_check
      _
    $region31: #{tpu_custom_call.1} parent=1 // pred_check_branch
      %498 = sbr.rel (0) target = $region33
    $region32: #{tpu_custom_call.1} parent=1 // pred_region
      %499 = dma.done [#allocation3], 16
    $region33: #{tpu_custom_call.1} parent=1 // pred_fallthru
      _
    %500 = vsyncpa [#allocation3], 1

</llo_original>
